<compile_context>
chip_gen: v6e
topology: v6e:2x2x1
jax: 0.10.0
libtpu: 0.0.40
codegen_flags: <defaults>
</compile_context>

<pallas_src>
import inspect

import jax
import jax.numpy as jnp
from jax.experimental import pallas as pl
from jax.experimental.pallas import tpu as pltpu


# ----------------------------------------------------------------------------
# InputIdentity: identity op. Per the performance review this is a zero-cost
# pass-through rather than a separate pallas_call: a dedicated identity kernel
# costs a full HBM->VMEM->HBM round trip plus launch overhead per input, while
# the wrapped module already consumes the unmodified tensors.
# ----------------------------------------------------------------------------
class InputIdentity:
    def __init__(self, input_name: str):
        self.input_name = input_name  # kept for debugging / attribution parity

    def __call__(self, x):
        return x


# ----------------------------------------------------------------------------
# Fused matmul + bias + relu Pallas kernel (tiled (M, N, K) grid, f32 acc).
# ----------------------------------------------------------------------------
def _matmul_bias_relu_kernel(xy_ref, w_ref, b_ref, o_ref, acc_ref):
    k = pl.program_id(2)

    @pl.when(k == 0)
    def _():
        acc_ref[...] = jnp.zeros_like(acc_ref)

    acc_ref[...] += jnp.dot(
        xy_ref[...], w_ref[...], preferred_element_type=jnp.float32
    )

    @pl.when(k == pl.num_programs(2) - 1)
    def _():
        out = acc_ref[...] + b_ref[...].astype(jnp.float32)  # bias only once
        o_ref[...] = jnp.maximum(out, 0.0).astype(o_ref.dtype)


def _pick_tile(dim: int, preferred: int) -> int:
    """Largest tile <= preferred that evenly divides `dim` (falls back to dim)."""
    if dim <= preferred:
        return dim
    t = preferred
    while t > 1 and dim % t != 0:
        t //= 2
    return t if dim % t == 0 else dim


def matmul_bias_relu(xy, w, b, *, out_dtype=jnp.float32,
                     tm_pref=256, tn_pref=256, tk_pref=512):
    """relu(xy @ w + b) with xy:[M,K], w:[K,N], b:[1,N]."""
    M, K = xy.shape
    K2, N = w.shape
    assert K == K2 and b.shape == (1, N)

    tm = _pick_tile(M, tm_pref)
    tn = _pick_tile(N, tn_pref)
    tk = _pick_tile(K, tk_pref)
    grid = (M // tm, N // tn, K // tk)

    def _isz(dt):
        return jnp.dtype(dt).itemsize

    cost = pl.CostEstimate(
        flops=2 * M * K * N,
        transcendentals=0,
        bytes_accessed=(M * K * _isz(xy.dtype) + K * N * _isz(w.dtype)
                        + N * _isz(b.dtype) + M * N * _isz(out_dtype)),
    )

    return pl.pallas_call(
        _matmul_bias_relu_kernel,
        out_shape=jax.ShapeDtypeStruct((M, N), out_dtype),
        grid_spec=pltpu.PrefetchScalarGridSpec(
            num_scalar_prefetch=0,
            grid=grid,
            in_specs=[
                pl.BlockSpec((tm, tk), lambda i, j, k: (i, k)),  # [x | y]
                pl.BlockSpec((tk, tn), lambda i, j, k: (k, j)),  # [Wx ; Wy]
                pl.BlockSpec((1, tn), lambda i, j, k: (0, j)),   # bias
            ],
            out_specs=pl.BlockSpec((tm, tn), lambda i, j, k: (i, j)),
            scratch_shapes=[pltpu.VMEM((tm, tn), jnp.float32)],
        ),
        compiler_params=pltpu.CompilerParams(
            dimension_semantics=("parallel", "parallel", "arbitrary")),
        cost_estimate=cost,
    )(xy, w, b)


# ----------------------------------------------------------------------------
# A small deterministic module to wrap: forward(x, y) = relu(x @ Wx + y @ Wy + b)
# Implemented as ONE fused K=2H contraction: relu([x|y] @ [Wx;Wy] + b).
# ----------------------------------------------------------------------------
class TwoInputLinearRelu:
    def __init__(self, hidden: int, key, compute_dtype=jnp.bfloat16):
        kx, ky, kb = jax.random.split(key, 3)
        scale = 1.0 / jnp.sqrt(hidden)
        self.compute_dtype = compute_dtype
        # f32 master copies (used for the reference check in __main__)
        self.wx = jax.random.normal(kx, (hidden, hidden), jnp.float32) * scale
        self.wy = jax.random.normal(ky, (hidden, hidden), jnp.float32) * scale
        self.b = jax.random.normal(kb, (1, hidden), jnp.float32) * scale
        # pre-stacked weight so the kernel runs a single K=2H MXU contraction
        self.w_stacked = jnp.concatenate([self.wx, self.wy], axis=0).astype(
            compute_dtype)

    def forward(self, x, y):
        # fuse the two matmuls: [x | y] @ [Wx ; Wy] — one contraction, bf16
        # operands (halves weight/input DMA bytes), f32 accumulation in-kernel.
        xy = jnp.concatenate([x, y], axis=-1).astype(self.compute_dtype)
        return matmul_bias_relu(xy, self.w_stacked, self.b,
                                out_dtype=jnp.float32)

    def __call__(self, x, y):
        return self.forward(x, y)


# ----------------------------------------------------------------------------
# ModelInputWrapper: mirrors captum's wrapper — one InputIdentity per named
# forward argument, each input routed through it, then the wrapped module is
# called with the (identical) inputs.
# ----------------------------------------------------------------------------
class ModelInputWrapper:
    def __init__(self, module_to_wrap):
        self.module = module_to_wrap
        # same introspection as the PyTorch original (skip `self`)
        self.arg_name_list = inspect.getfullargspec(module_to_wrap.forward).args[1:]
        self.input_maps = {
            arg_name: InputIdentity(arg_name) for arg_name in self.arg_name_list
        }

    def __call__(self, *args, **kwargs):
        args_list = list(args)
        for idx, (arg_name, arg) in enumerate(zip(self.arg_name_list, args_list)):
            args_list[idx] = self.input_maps[arg_name](arg)
        kwargs = dict(kwargs)
        for arg_name in kwargs.keys():
            kwargs[arg_name] = self.input_maps[arg_name](kwargs[arg_name])
        return self.module(*tuple(args_list), **kwargs)


if __name__ == "__main__":
    key = jax.random.PRNGKey(0)
    k_model, k_x, k_y = jax.random.split(key, 3)

    batch, hidden = 8, 128  # hidden is a multiple of 128 -> lane-dense stores
    x = jax.random.normal(k_x, (batch, hidden), jnp.float32)
    y = jax.random.normal(k_y, (batch, hidden), jnp.float32)

    inner = TwoInputLinearRelu(hidden, k_model)
    wrapped = ModelInputWrapper(inner)

    # jit the whole wrapped forward: single dispatch, kernels scheduled by XLA.
    run = jax.jit(lambda x, y: wrapped(x, y=y))  # positional + keyword mix

    out = jax.block_until_ready(run(x, y))

    # reference check (pure JAX/XLA with the same bf16 operands, f32 accum)
    xb, yb = x.astype(jnp.bfloat16), y.astype(jnp.bfloat16)
    wxb = inner.wx.astype(jnp.bfloat16)
    wyb = inner.wy.astype(jnp.bfloat16)
    ref = jnp.maximum(
        jnp.dot(xb, wxb, preferred_element_type=jnp.float32)
        + jnp.dot(yb, wyb, preferred_element_type=jnp.float32)
        + inner.b,
        0.0,
    )
    assert out.shape == (batch, hidden)
    assert out.dtype == jnp.float32
    assert jnp.allclose(out, ref, atol=2e-2, rtol=2e-2), float(
        jnp.max(jnp.abs(out - ref)))

    # identity layers must be exact (zero-cost) pass-throughs
    assert wrapped.input_maps["x"](x) is x
    assert jnp.array_equal(wrapped.input_maps["y"](y), y)

    print("KERNEL_OK")
</pallas_src>

<mosaic_0001>
module attributes {stable_mosaic.version = 11 : i64} {
  func.func @_matmul_bias_relu_kernel(%arg0: i32, %arg1: i32, %arg2: i32, %arg3: memref<8x256xbf16, #tpu.memory_space<vmem>>, %arg4: memref<256x128xbf16, #tpu.memory_space<vmem>>, %arg5: memref<1x128xf32, #tpu.memory_space<vmem>>, %arg6: memref<8x128xf32, #tpu.memory_space<vmem>>, %arg7: memref<8x128xf32, #tpu.memory_space<vmem>>) attributes {dimension_semantics = [#tpu.dimension_semantics<parallel>, #tpu.dimension_semantics<parallel>, #tpu.dimension_semantics<arbitrary>], iteration_bounds = array<i64: 1, 1, 1>, scalar_prefetch = 0 : i64, scratch_operands = 1 : i64, tpu.core_type = #tpu.core_type<tc>, window_params = [{transform_indices = @transform_0, window_bounds = array<i64: 8, 256>}, {transform_indices = @transform_1, window_bounds = array<i64: 256, 128>}, {transform_indices = @transform_2, window_bounds = array<i64: 1, 128>}, {transform_indices = @transform_3, window_bounds = array<i64: 8, 128>}]} {
    %c0_i32 = arith.constant 0 : i32
    %0 = arith.cmpi eq, %arg2, %c0_i32 : i32
    %1 = arith.extui %0 : i1 to i32
    %c0_i32_0 = arith.constant 0 : i32
    %2 = arith.cmpi ne, %1, %c0_i32_0 : i32
    scf.if %2 {
      %cst_10 = arith.constant 0.000000e+00 : f32
      %12 = vector.broadcast %cst_10 : f32 to vector<8x128xf32>
      %c0_11 = arith.constant 0 : index
      %c0_12 = arith.constant 0 : index
      %13 = vector.load %arg7[%c0_11, %c0_12] : memref<8x128xf32, #tpu.memory_space<vmem>>, vector<8x128xf32>
      tpu.vector_store %arg7[%c0_11, %c0_12], %12 {strides = array<i32>} : memref<8x128xf32, #tpu.memory_space<vmem>>, vector<8x128xf32>,
    } else {
    }
    %c0 = arith.constant 0 : index
    %c0_1 = arith.constant 0 : index
    %3 = vector.load %arg7[%c0, %c0_1] : memref<8x128xf32, #tpu.memory_space<vmem>>, vector<8x128xf32>
    %c0_2 = arith.constant 0 : index
    %c0_3 = arith.constant 0 : index
    %4 = vector.load %arg3[%c0_2, %c0_3] : memref<8x256xbf16, #tpu.memory_space<vmem>>, vector<8x256xbf16>
    %c0_4 = arith.constant 0 : index
    %c0_5 = arith.constant 0 : index
    %5 = vector.load %arg4[%c0_4, %c0_5] : memref<256x128xbf16, #tpu.memory_space<vmem>>, vector<256x128xbf16>
    %cst = arith.constant dense<0.000000e+00> : vector<8x128xf32>
    %6 = tpu.matmul %4, %5, %cst {dimension_numbers = #tpu.dot_dimension_numbers<[1], [0], [0], [1], [0, 0, 1, 1], [], []>} : vector<8x256xbf16>, vector<256x128xbf16>, vector<8x128xf32> -> vector<8x128xf32>
    %7 = arith.addf %3, %6 : vector<8x128xf32>
    %c0_6 = arith.constant 0 : index
    %c0_7 = arith.constant 0 : index
    %8 = vector.load %arg7[%c0_6, %c0_7] : memref<8x128xf32, #tpu.memory_space<vmem>>, vector<8x128xf32>
    tpu.vector_store %arg7[%c0_6, %c0_7], %7 {strides = array<i32>} : memref<8x128xf32, #tpu.memory_space<vmem>>, vector<8x128xf32>,
    %c0_i32_8 = arith.constant 0 : i32
    %9 = arith.cmpi eq, %arg2, %c0_i32_8 : i32
    %10 = arith.extui %9 : i1 to i32
    %c0_i32_9 = arith.constant 0 : i32
    %11 = arith.cmpi ne, %10, %c0_i32_9 : i32
    scf.if %11 {
      %c0_10 = arith.constant 0 : index
      %c0_11 = arith.constant 0 : index
      %12 = vector.load %arg7[%c0_10, %c0_11] : memref<8x128xf32, #tpu.memory_space<vmem>>, vector<8x128xf32>
      %c0_12 = arith.constant 0 : index
      %c0_13 = arith.constant 0 : index
      %13 = vector.load %arg5[%c0_12, %c0_13] : memref<1x128xf32, #tpu.memory_space<vmem>>, vector<1x128xf32>
      %14 = vector.broadcast %13 : vector<1x128xf32> to vector<8x128xf32>
      %15 = arith.addf %12, %14 : vector<8x128xf32>
      %cst_14 = arith.constant 0.000000e+00 : f32
      %16 = vector.broadcast %cst_14 : f32 to vector<8x128xf32>
      %17 = arith.maximumf %15, %16 : vector<8x128xf32>
      %c0_15 = arith.constant 0 : index
      %c0_16 = arith.constant 0 : index
      %18 = vector.load %arg6[%c0_15, %c0_16] : memref<8x128xf32, #tpu.memory_space<vmem>>, vector<8x128xf32>
      tpu.vector_store %arg6[%c0_15, %c0_16], %17 {strides = array<i32>} : memref<8x128xf32, #tpu.memory_space<vmem>>, vector<8x128xf32>,
    } else {
    }
    return
  }
  func.func @transform_0(%arg0: i32, %arg1: i32, %arg2: i32) -> (i32, i32) {
    %c0_i32 = arith.constant 0 : i32
    return %arg0, %arg2 : i32, i32
  }
  func.func @transform_1(%arg0: i32, %arg1: i32, %arg2: i32) -> (i32, i32) {
    %c0_i32 = arith.constant 0 : i32
    return %arg2, %arg1 : i32, i32
  }
  func.func @transform_2(%arg0: i32, %arg1: i32, %arg2: i32) -> (i32, i32) {
    %c0_i32 = arith.constant 0 : i32
    %c0_i32_0 = arith.constant 0 : i32
    return %c0_i32, %arg1 : i32, i32
  }
  func.func @transform_3(%arg0: i32, %arg1: i32, %arg2: i32) -> (i32, i32) {
    %c0_i32 = arith.constant 0 : i32
    return %arg0, %arg1 : i32, i32
  }
}

</mosaic_0001>

<llo_original>
// kernel: _lambda_.1
$region0: #{_lambda_.1}
  #allocation0 [shape = 'u32[]', space=smem, size = 0x4, offset = 0x4, fixed_abs, tag = 'smem constant byte address 0x4 - core index']
  #allocation1 [shape = 'u32[144,128]{1,0:T(1,128)}', space=vmem, size = 0x12000, scoped, tag = 'internal scratch']
  #allocation2 [shape = 'f32[8,128]{1,0:T(8,128)}', space=vmem, size = 0x1000, scoped, tag = 'scratch operand']
  %s0 = inlined_call_operand.vmem [shape: bf16[8,256], index: 0, kind: input, shape index: {}]
  %s1 = inlined_call_operand.hbm [shape: bf16[256,128], index: 1, kind: input, shape index: {}]
  %s2 = inlined_call_operand.vmem [shape: f32[1,128], index: 2, kind: input, shape index: {}]
  %s3 = inlined_call_operand.hbm [shape: f32[8,128], index: 3, kind: output, shape index: {}]
  %s4 = sld [smem:[#allocation0]]
  $region34: #{_lambda_.1} parent=0
    _
  %s6 = ssub.s32 1, %s4
  %s7 = scalar_select 0, %s6, %s4
  $region1: #{_lambda_.1} parent=0
    #allocation3 [shape = 'u8[65536]{0}', space=vmem, size = 0x10000, scoped, tag = 'input window, operand 1, single buffered']
    #allocation4 [shape = 's32[1]{0}', space=sflag, size = 0x4, scoped, tag = 'scoped memory for _lambda_.1']
    #allocation5 [shape = 's32[1]{0}', space=sflag, size = 0x4, scoped, tag = 'scoped memory for _lambda_.1']
    #allocation6 [shape = 'u8[4096]{0}', space=vmem, size = 0x1000, scoped, tag = 'output window, operand 0, single buffered']
    %8 = vsyncpa [#allocation4], 0
    %9 = vsyncpa [#allocation5], 0
    // Predicated region
    $region2: #{_lambda_.1} parent=1 // pred_check
      _
    $region3: #{_lambda_.1} parent=1 // pred_check_branch
      %11 = sbr.rel (0) target = $region5
    $region4: #{_lambda_.1} parent=1 // pred_region
      _
    $region5: #{_lambda_.1} parent=1 // pred_fallthru
      _
    // Predicated region
    $region6: #{_lambda_.1} parent=1 // pred_check
      _
    $region7: #{_lambda_.1} parent=1 // pred_check_branch
      %13 = sbr.rel (0) target = $region9
    $region8: #{_lambda_.1} parent=1 // pred_region
      %s15 = ssub.s32 2048, 2048
      %16 = vsyncadd [#allocation4], %s15
      %s17 = sshll.u32 [#allocation3], 4
      %s18 = int_to_ptr.vmem [resolvable:$true] %s17
      %23 = dma.hbm_to_vmem [thread:$0]  %s1, 2048, %s18, [#allocation4], 64, 64, 4
    $region9: #{_lambda_.1} parent=1 // pred_fallthru
      _
    // Predicated region
    $region10: #{_lambda_.1} parent=1 // pred_check
      _
    $region11: #{_lambda_.1} parent=1 // pred_check_branch
      %25 = sbr.rel (0) target = $region13
    $region12: #{_lambda_.1} parent=1 // pred_region
      _
    $region13: #{_lambda_.1} parent=1 // pred_fallthru
      _
    // Predicated region
    $region14: #{_lambda_.1} parent=1 // pred_check
      _
    $region15: #{_lambda_.1} parent=1 // pred_check_branch
      %27 = sbr.rel (0) target = $region17
    $region16: #{_lambda_.1} parent=1 // pred_region
      %28 = dma.done [#allocation4], 2048
    $region17: #{_lambda_.1} parent=1 // pred_fallthru
      _
    %p30 = scmp.eq.s32.totalorder 0, 0
    // Predicated region
    $region18: #{_lambda_.1} parent=1 // pred_check
      %p31 = pneg %p30
    $region19: #{_lambda_.1} parent=1 // pred_check_branch
      %33 = sbr.rel (%p31) target = $region21
    $region20: #{_lambda_.1} parent=1 // pred_region
      %34 = vst [vmem:[#allocation2] sm:$0xff] 0.0
    $region21: #{_lambda_.1} parent=1 // pred_fallthru
      _
    %v35 = vld [vmem:[#allocation2] sm:$0xff]
    %v36 = vld [vmem:[%s0] sm:$0xff]
    %v37 = vld [vmem:[#allocation3] sm:$0xf]
    %v38 = vld [vmem:[#allocation3 + $0x4] sm:$0xf]
    %v39 = vld [vmem:[#allocation3 + $0x8] sm:$0xf]
    %v40 = vld [vmem:[#allocation3 + $0xc] sm:$0xf]
    %v41 = vld [vmem:[#allocation3 + $0x10] sm:$0xf]
    %v42 = vld [vmem:[#allocation3 + $0x14] sm:$0xf]
    %v43 = vld [vmem:[#allocation3 + $0x18] sm:$0xf]
    %v44 = vld [vmem:[#allocation3 + $0x1c] sm:$0xf]
    %v45 = vld [vmem:[#allocation3 + $0x20] sm:$0xf]
    %v46 = vld [vmem:[#allocation3 + $0x24] sm:$0xf]
    %v47 = vld [vmem:[#allocation3 + $0x28] sm:$0xf]
    %v48 = vld [vmem:[#allocation3 + $0x2c] sm:$0xf]
    %v49 = vld [vmem:[#allocation3 + $0x30] sm:$0xf]
    %v50 = vld [vmem:[#allocation3 + $0x34] sm:$0xf]
    %v51 = vld [vmem:[#allocation3 + $0x38] sm:$0xf]
    %v52 = vld [vmem:[#allocation3 + $0x3c] sm:$0xf]
    %v53 = vld [vmem:[#allocation3 + $0x40] sm:$0xf]
    %v54 = vld [vmem:[#allocation3 + $0x44] sm:$0xf]
    %v55 = vld [vmem:[#allocation3 + $0x48] sm:$0xf]
    %v56 = vld [vmem:[#allocation3 + $0x4c] sm:$0xf]
    %v57 = vld [vmem:[#allocation3 + $0x50] sm:$0xf]
    %v58 = vld [vmem:[#allocation3 + $0x54] sm:$0xf]
    %v59 = vld [vmem:[#allocation3 + $0x58] sm:$0xf]
    %v60 = vld [vmem:[#allocation3 + $0x5c] sm:$0xf]
    %v61 = vld [vmem:[#allocation3 + $0x60] sm:$0xf]
    %v62 = vld [vmem:[#allocation3 + $0x64] sm:$0xf]
    %v63 = vld [vmem:[#allocation3 + $0x68] sm:$0xf]
    %v64 = vld [vmem:[#allocation3 + $0x6c] sm:$0xf]
    %v65 = vld [vmem:[#allocation3 + $0x70] sm:$0xf]
    %v66 = vld [vmem:[#allocation3 + $0x74] sm:$0xf]
    %v67 = vld [vmem:[#allocation3 + $0x78] sm:$0xf]
    %v68 = vld [vmem:[#allocation3 + $0x7c] sm:$0xf]
    %v70 = vunpack.c.l.b16 %v36
    %v71 = vunpack.c.h.b16 %v36
    %v72 = vpack.c.b16 %v70, %v70
    %v73 = vpack.c.b16 %v71, %v71
    %v108 = vunpack.c.l.b16 %v37
    %v109 = vunpack.c.l.b16 %v38
    %v110 = vunpack.c.l.b16 %v39
    %v111 = vunpack.c.l.b16 %v40
    %v112 = vunpack.c.l.b16 %v41
    %v113 = vunpack.c.l.b16 %v42
    %v114 = vunpack.c.l.b16 %v43
    %v115 = vunpack.c.l.b16 %v44
    %v116 = vunpack.c.l.b16 %v45
    %v117 = vunpack.c.l.b16 %v46
    %v118 = vunpack.c.l.b16 %v47
    %v119 = vunpack.c.l.b16 %v48
    %v120 = vunpack.c.l.b16 %v49
    %v121 = vunpack.c.l.b16 %v50
    %v122 = vunpack.c.l.b16 %v51
    %v123 = vunpack.c.l.b16 %v52
    %v124 = vunpack.c.l.b16 %v53
    %v125 = vunpack.c.l.b16 %v54
    %v126 = vunpack.c.l.b16 %v55
    %v127 = vunpack.c.l.b16 %v56
    %v128 = vunpack.c.l.b16 %v57
    %v129 = vunpack.c.l.b16 %v58
    %v130 = vunpack.c.l.b16 %v59
    %v131 = vunpack.c.l.b16 %v60
    %v132 = vunpack.c.l.b16 %v61
    %v133 = vunpack.c.l.b16 %v62
    %v134 = vunpack.c.l.b16 %v63
    %v135 = vunpack.c.l.b16 %v64
    %v136 = vunpack.c.l.b16 %v65
    %v137 = vunpack.c.l.b16 %v66
    %v138 = vunpack.c.l.b16 %v67
    %v139 = vunpack.c.l.b16 %v68
    %v140 = vpack.c.b16 %v109, %v108
    %v141 = vpack.c.b16 %v111, %v110
    %v142 = vpack.c.b16 %v113, %v112
    %v143 = vpack.c.b16 %v115, %v114
    %v144 = vpack.c.b16 %v117, %v116
    %v145 = vpack.c.b16 %v119, %v118
    %v146 = vpack.c.b16 %v121, %v120
    %v147 = vpack.c.b16 %v123, %v122
    %v148 = vpack.c.b16 %v125, %v124
    %v149 = vpack.c.b16 %v127, %v126
    %v150 = vpack.c.b16 %v129, %v128
    %v151 = vpack.c.b16 %v131, %v130
    %v152 = vpack.c.b16 %v133, %v132
    %v153 = vpack.c.b16 %v135, %v134
    %v154 = vpack.c.b16 %v137, %v136
    %v155 = vpack.c.b16 %v139, %v138
    %172 = vmatprep.subr.bf16.mxu0 0
    %173 = vmatpush1.bf16.msra.mxu0 %v147
    %174 = vmatprep.subr.bf16.mxu0 0
    %175 = vmatpush1.bf16.msra.mxu0 %v146
    %176 = vmatprep.subr.bf16.mxu0 0
    %177 = vmatpush1.bf16.msra.mxu0 %v145
    %178 = vmatprep.subr.bf16.mxu0 0
    %179 = vmatpush1.bf16.msra.mxu0 %v144
    %180 = vmatprep.subr.bf16.mxu0 0
    %181 = vmatpush1.bf16.msra.mxu0 %v143
    %182 = vmatprep.subr.bf16.mxu0 0
    %183 = vmatpush1.bf16.msra.mxu0 %v142
    %184 = vmatprep.subr.bf16.mxu0 0
    %185 = vmatpush1.bf16.msra.mxu0 %v141
    %186 = vmatprep.subr.bf16.mxu0 0
    %187 = vmatpush1.bf16.msra.mxu0 %v140
    %188 = vmatprep.subr.bf16.mxu0 0
    %189 = vmatpush2.bf16.msra.mxu0 %v155
    %190 = vmatprep.subr.bf16.mxu0 0
    %191 = vmatpush2.bf16.msra.mxu0 %v154
    %192 = vmatprep.subr.bf16.mxu0 0
    %193 = vmatpush2.bf16.msra.mxu0 %v153
    %194 = vmatprep.subr.bf16.mxu0 0
    %195 = vmatpush2.bf16.msra.mxu0 %v152
    %196 = vmatprep.subr.bf16.mxu0 0
    %197 = vmatpush2.bf16.msra.mxu0 %v151
    %198 = vmatprep.subr.bf16.mxu0 0
    %199 = vmatpush2.bf16.msra.mxu0 %v150
    %200 = vmatprep.subr.bf16.mxu0 0
    %201 = vmatpush2.bf16.msra.mxu0 %v149
    %202 = vmatprep.subr.bf16.mxu0 0
    %203 = vmatpush2.bf16.msra.mxu0 %v148
    %204 = vmatprep.mubr.bf16.mxu0 %v73
    %205 = vmatmul.mubr.bf16.gmra.mxu0 %v72
    %v206 = vpop.f32.mrf.mxu0
    %v207 = vadd.f32 0.0, %v206
    %v208 = vpop.f32.mrf.mxu0
    %v209 = vpop.f32.mrf.mxu0
    %v210 = vpop.f32.mrf.mxu0
    %211 = vdwg.mxu0
    %v212 = vadd.f32 %v35, %v207
    %213 = vst [vmem:[#allocation2] sm:$0xff] %v212
    // Predicated region
    $region22: #{_lambda_.1} parent=1 // pred_check
      %p214 = pneg %p30
    $region23: #{_lambda_.1} parent=1 // pred_check_branch
      %216 = sbr.rel (%p214) target = $region25
    $region24: #{_lambda_.1} parent=1 // pred_region
      %v217 = vld [vmem:[#allocation2] sm:$0xff]
      %v218 = vld [vmem:[%s2] sm:$0x1]
      %v220 = vlaneseq
      %v221 = vshrl.u32 %v220, 7
      %v222 = vsub.s32 0, %v221
      %v223 = vrot.slane %v218, %v222
      %v225 = vadd.f32 %v217, %v223
      %v226 = vmax.f32 %v225, 0.0
      %227 = vst [vmem:[#allocation6] sm:$0xff] %v226
    $region25: #{_lambda_.1} parent=1 // pred_fallthru
      _
    // Predicated region
    $region26: #{_lambda_.1} parent=1 // pred_check
      _
    $region27: #{_lambda_.1} parent=1 // pred_check_branch
      %229 = sbr.rel (0) target = $region29
    $region28: #{_lambda_.1} parent=1 // pred_region
      %s231 = ssub.s32 128, 128
      %232 = vsyncadd [#allocation5], %s231
      %s234 = sshll.u32 [#allocation6], 4
      %s235 = int_to_ptr.vmem [resolvable:$true] %s234
      %237 = dma.vmem_to_hbm [thread:$0]  %s235, 128, %s3, [#allocation5]
    $region29: #{_lambda_.1} parent=1 // pred_fallthru
      _
    // Predicated region
    $region30: #{_lambda_.1} parent=1 // pred_check
      _
    $region31: #{_lambda_.1} parent=1 // pred_check_branch
      %239 = sbr.rel (0) target = $region33
    $region32: #{_lambda_.1} parent=1 // pred_region
      %240 = dma.done [#allocation5], 128
    $region33: #{_lambda_.1} parent=1 // pred_fallthru
      _
    %241 = vsyncpa [#allocation4], 1
    %242 = vsyncpa [#allocation5], 1

</llo_original>
